<compile_context>
chip_gen: v7x
topology: tpu7x:2x2x1
jax: 0.10.0
libtpu: 0.0.40
codegen_flags: <defaults>
</compile_context>

<pallas_src>
import functools

import jax
import jax.numpy as jnp
from jax import lax
from jax.experimental import pallas as pl
from jax.experimental.pallas import tpu as pltpu

# DKM hyper-parameters (match the PyTorch defaults).
TEMP = 0.5
THRESHOLD = 1e-4
MAX_ITER = 100
EPS = 1e-6


def _pick_tile(n, target, align):
    """Largest multiple of `align` that is <= target and divides n, else n."""
    if n <= target:
        return n
    t = (target // align) * align
    while t >= align:
        if n % t == 0:
            return t
        t -= align
    return n


# ----------------------------------------------------------------------------
# Kernel 1: dual-tower encode tail + elementwise product (tiled over batch)
# ----------------------------------------------------------------------------
def _encode_kernel(q_tok_ref, p_tok_ref, wq_ref, bq_ref, wp_ref, bp_ref, qp_ref):
    inv_seq = 1.0 / float(q_tok_ref.shape[1])
    # Mean pooling over the sequence (sublane) axis: one native reduce.
    q_pool = jnp.sum(q_tok_ref[...], axis=1) * inv_seq
    p_pool = jnp.sum(p_tok_ref[...], axis=1) * inv_seq

    # Dense + activation per tower (sentence_transformers.models.Dense).
    qw = jax.nn.sigmoid(
        jnp.dot(q_pool, wq_ref[...], preferred_element_type=jnp.float32)
        + bq_ref[...]
    )
    p = jnp.tanh(
        jnp.dot(p_pool, wp_ref[...], preferred_element_type=jnp.float32)
        + bp_ref[...]
    )
    qp_ref[...] = qw * p


# ----------------------------------------------------------------------------
# Kernel 2: DKM clustering loop -> soft assignments `a`
# ----------------------------------------------------------------------------
def _dkm_kernel(x_ref, a_ref, *, k):
    X = x_ref[...]                                   # (n, d)
    n = X.shape[0]
    x_sq = jnp.sum(X * X, axis=1, keepdims=True)     # (n, 1)

    def assign(C_t):
        # C_t is the transposed centroid matrix, shape (d, k).
        # dist(X, C) via ||x||^2 + ||c||^2 - 2 x.c  (MXU matmul, clamped sqrt).
        c_sq = jnp.sum(C_t * C_t, axis=0, keepdims=True)              # (1, k)
        xc = jnp.dot(X, C_t, preferred_element_type=jnp.float32)      # (n, k)
        d2 = jnp.maximum(x_sq + c_sq - 2.0 * xc, 0.0)
        logits = -jnp.sqrt(d2) * (1.0 / TEMP)
        logits = logits - jnp.max(logits, axis=1, keepdims=True)
        e = jnp.exp(logits)
        denom = jnp.sum(e, axis=1, keepdims=True)                     # (n, 1)
        return e * pl.reciprocal(denom, approx=True)                  # (n, k)

    def update(a):
        # C_new^T = X^T @ (a / a_sum)  -- column-pre-normalized a, MXU matmul.
        a_sum = jnp.sum(a, axis=0, keepdims=True) + EPS               # (1, k)
        a_norm = a * pl.reciprocal(a_sum, approx=True)
        return lax.dot_general(X, a_norm, (((0,), (0,)), ((), ())),
                               preferred_element_type=jnp.float32)    # (d, k)

    # C_init = X[:k] (transposed) via a one-hot selection matmul — avoids any
    # in-kernel transpose and any extra HBM input for C_init.
    row_ids = lax.broadcasted_iota(jnp.int32, (n, k), 0)
    col_ids = lax.broadcasted_iota(jnp.int32, (n, k), 1)
    sel = (row_ids == col_ids).astype(jnp.float32)                    # (n, k)
    C0 = lax.dot_general(X, sel, (((0,), (0,)), ((), ())),
                         preferred_element_type=jnp.float32)          # (d, k)

    a0 = assign(C0)
    Cn0 = update(a0)
    diff0 = jnp.sum(jnp.abs(Cn0 - C0))

    def cond(carry):
        i, _, _, diff = carry
        return jnp.logical_and(diff > THRESHOLD, i < MAX_ITER)

    def body(carry):
        i, _, C_new, _ = carry
        C = C_new
        a = assign(C)
        Cn = update(a)
        return i + 1, C, Cn, jnp.sum(jnp.abs(Cn - C))

    _, C_fin, _, _ = lax.while_loop(cond, body, (jnp.int32(0), C0, Cn0, diff0))

    # The reference returns the softmax assignments computed against the
    # final C (self.C), so recompute once here instead of carrying `a`.
    a_ref[...] = assign(C_fin)


# ----------------------------------------------------------------------------
# Kernel 3: sim_mat tile = 1 / (1 + cdist(a_rows, a_cols))
# ----------------------------------------------------------------------------
def _sim_kernel(a_row_ref, a_col_ref, sim_ref):
    ar = a_row_ref[...]                                               # (tr, k)
    ac = a_col_ref[...]                                               # (tc, k)
    r_sq = jnp.sum(ar * ar, axis=1, keepdims=True)                    # (tr, 1)
    # Column-block squared norms laid out as a (1, tc) row without a transpose.
    ones_row = jnp.ones((1, ac.shape[1]), jnp.float32)
    c_sq = lax.dot_general(ones_row, ac * ac, (((1,), (1,)), ((), ())),
                           preferred_element_type=jnp.float32)        # (1, tc)
    cross = lax.dot_general(ar, ac, (((1,), (1,)), ((), ())),
                            preferred_element_type=jnp.float32)       # (tr, tc)
    d2 = jnp.maximum(r_sq + c_sq - 2.0 * cross, 0.0)
    sim_ref[...] = 1.0 / (1.0 + jnp.sqrt(d2))


# ----------------------------------------------------------------------------
# Wrappers
# ----------------------------------------------------------------------------
def encode(q_tok, p_tok, wq, bq, wp, bp, *, tile_n=None):
    n, seq, hidden = q_tok.shape
    emb_dim = wq.shape[1]
    if tile_n is None:
        tile_n = _pick_tile(n, 64, 8)
    assert n % tile_n == 0
    bq2 = bq.reshape(1, emb_dim).astype(jnp.float32)
    bp2 = bp.reshape(1, emb_dim).astype(jnp.float32)
    return pl.pallas_call(
        _encode_kernel,
        out_shape=jax.ShapeDtypeStruct((n, emb_dim), jnp.float32),
        grid=(n // tile_n,),
        in_specs=[
            pl.BlockSpec((tile_n, seq, hidden), lambda i: (i, 0, 0)),
            pl.BlockSpec((tile_n, seq, hidden), lambda i: (i, 0, 0)),
            pl.BlockSpec((hidden, emb_dim), lambda i: (0, 0)),
            pl.BlockSpec((1, emb_dim), lambda i: (0, 0)),
            pl.BlockSpec((hidden, emb_dim), lambda i: (0, 0)),
            pl.BlockSpec((1, emb_dim), lambda i: (0, 0)),
        ],
        out_specs=pl.BlockSpec((tile_n, emb_dim), lambda i: (i, 0)),
        compiler_params=pltpu.CompilerParams(
            dimension_semantics=("parallel",)),
    )(q_tok, p_tok, wq, bq2, wp, bp2)


def dkm_assignments(qp, k):
    # Global clustering iteration -> inherently whole-array; X (n,d) and a (n,k)
    # stay comfortably in VMEM for realistic n/d/k.
    n, d = qp.shape
    if k > n:
        raise ValueError(f"k={k} must be <= n={n} (C_init = qp[:k]).")
    return pl.pallas_call(
        functools.partial(_dkm_kernel, k=k),
        out_shape=jax.ShapeDtypeStruct((n, k), jnp.float32),
        grid=(1,),
        in_specs=[pl.BlockSpec((n, d), lambda i: (0, 0))],
        out_specs=pl.BlockSpec((n, k), lambda i: (0, 0)),
        compiler_params=pltpu.CompilerParams(
            dimension_semantics=("arbitrary",)),
    )(qp)


def sim_matrix(a, *, tile_rows=None, tile_cols=None):
    n, k = a.shape
    if tile_rows is None:
        tile_rows = _pick_tile(n, 256, 8)
    if tile_cols is None:
        tile_cols = _pick_tile(n, 256, 128)   # lane-dense output tiles
    assert n % tile_rows == 0 and n % tile_cols == 0
    return pl.pallas_call(
        _sim_kernel,
        out_shape=jax.ShapeDtypeStruct((n, n), jnp.float32),
        grid=(n // tile_rows, n // tile_cols),
        in_specs=[
            pl.BlockSpec((tile_rows, k), lambda i, j: (i, 0)),
            pl.BlockSpec((tile_cols, k), lambda i, j: (j, 0)),
        ],
        out_specs=pl.BlockSpec((tile_rows, tile_cols), lambda i, j: (i, j)),
        compiler_params=pltpu.CompilerParams(
            dimension_semantics=("parallel", "parallel")),
    )(a, a)


def query_specific_clustering_dual_forward(q_tok, p_tok, params, k, *,
                                           encode_tile=None,
                                           sim_tiles=(None, None)):
    qp = encode(q_tok, p_tok,
                params["wq"], params["bq"], params["wp"], params["bp"],
                tile_n=encode_tile)
    a = dkm_assignments(qp, k)
    return sim_matrix(a, tile_rows=sim_tiles[0], tile_cols=sim_tiles[1])


# ----------------------------------------------------------------------------
# Pure-JAX reference (mirrors PyTorch semantics) for a sanity check
# ----------------------------------------------------------------------------
def _reference_forward(q_tok, p_tok, params, k):
    q_pool = jnp.mean(q_tok, axis=1)
    p_pool = jnp.mean(p_tok, axis=1)
    qw = jax.nn.sigmoid(q_pool @ params["wq"] + params["bq"])
    p = jnp.tanh(p_pool @ params["wp"] + params["bp"])
    X = qw * p
    C = X[:k]

    def step(C):
        dist = jnp.sqrt(jnp.sum((X[:, None, :] - C[None, :, :]) ** 2, axis=2))
        a = jax.nn.softmax(-dist / TEMP, axis=1)
        a_sum = jnp.sum(a, axis=0) + EPS
        C_new = (a.T @ X) / a_sum[:, None]
        return a, C_new

    a, C_new = step(C)
    diff = jnp.sum(jnp.abs(C_new - C))
    i = 0
    while float(diff) > THRESHOLD and i < MAX_ITER:
        C = C_new
        a, C_new = step(C)
        diff = jnp.sum(jnp.abs(C_new - C))
        i += 1
    dist_aa = jnp.sqrt(jnp.sum((a[:, None, :] - a[None, :, :]) ** 2, axis=2))
    return 1.0 / (1.0 + dist_aa)


# ----------------------------------------------------------------------------
if __name__ == "__main__":
    n, seq, hidden, emb_dim, k = 16, 8, 32, 32, 4

    key = jax.random.PRNGKey(0)
    kq, kp, kwq, kbq, kwp, kbp = jax.random.split(key, 6)

    # Synthetic "transformer output" token embeddings for both towers.
    q_tokens = jax.random.normal(kq, (n, seq, hidden), dtype=jnp.float32)
    p_tokens = jax.random.normal(kp, (n, seq, hidden), dtype=jnp.float32)

    # Deterministic Dense-layer parameters (q tower: sigmoid, p tower: tanh).
    params = {
        "wq": 0.2 * jax.random.normal(kwq, (hidden, emb_dim), dtype=jnp.float32),
        "bq": 0.1 * jax.random.normal(kbq, (emb_dim,), dtype=jnp.float32),
        "wp": 0.2 * jax.random.normal(kwp, (hidden, emb_dim), dtype=jnp.float32),
        "bp": 0.1 * jax.random.normal(kbp, (emb_dim,), dtype=jnp.float32),
    }

    # Small tiles chosen explicitly so the demo exercises multi-block grids
    # (encode grid = (2,), sim grid = (2, 1)) while keeping shapes tiny.
    sim = query_specific_clustering_dual_forward(
        q_tokens, p_tokens, params, k,
        encode_tile=8, sim_tiles=(8, None))
    sim = jax.block_until_ready(sim)

    ref = _reference_forward(q_tokens, p_tokens, params, k)
    assert sim.shape == (n, n)
    assert bool(jnp.all(jnp.isfinite(sim)))
    assert bool(jnp.allclose(sim, ref, rtol=2e-2, atol=2e-2)), (
        "Pallas result deviates from reference")

    print("KERNEL_OK")
</pallas_src>

<mosaic_0001>
module attributes {stable_mosaic.version = 11 : i64} {
  func.func @_encode_kernel(%arg0: i32, %arg1: memref<8x8x32xf32, #tpu.memory_space<vmem>>, %arg2: memref<8x8x32xf32, #tpu.memory_space<vmem>>, %arg3: memref<32x32xf32, #tpu.memory_space<vmem>>, %arg4: memref<1x32xf32, #tpu.memory_space<vmem>>, %arg5: memref<32x32xf32, #tpu.memory_space<vmem>>, %arg6: memref<1x32xf32, #tpu.memory_space<vmem>>, %arg7: memref<8x32xf32, #tpu.memory_space<vmem>>) attributes {dimension_semantics = [#tpu.dimension_semantics<parallel>], iteration_bounds = array<i64: 2>, scalar_prefetch = 0 : i64, scratch_operands = 0 : i64, tpu.core_type = #tpu.core_type<tc>, window_params = [{transform_indices = @transform_0, window_bounds = array<i64: 8, 8, 32>}, {transform_indices = @transform_1, window_bounds = array<i64: 8, 8, 32>}, {pipeline_mode = #tpu.pipeline_mode<synchronous>, transform_indices = @transform_2, window_bounds = array<i64: 32, 32>}, {pipeline_mode = #tpu.pipeline_mode<synchronous>, transform_indices = @transform_3, window_bounds = array<i64: 1, 32>}, {pipeline_mode = #tpu.pipeline_mode<synchronous>, transform_indices = @transform_4, window_bounds = array<i64: 32, 32>}, {pipeline_mode = #tpu.pipeline_mode<synchronous>, transform_indices = @transform_5, window_bounds = array<i64: 1, 32>}, {transform_indices = @transform_6, window_bounds = array<i64: 8, 32>}]} {
    %c0 = arith.constant 0 : index
    %c0_0 = arith.constant 0 : index
    %c0_1 = arith.constant 0 : index
    %0 = vector.load %arg1[%c0, %c0_0, %c0_1] : memref<8x8x32xf32, #tpu.memory_space<vmem>>, vector<8x8x32xf32>
    %cst = arith.constant dense<0.000000e+00> : vector<8x32xf32>
    %1 = vector.multi_reduction <add>, %0, %cst [1] : vector<8x8x32xf32> to vector<8x32xf32>
    %cst_2 = arith.constant 1.250000e-01 : f32
    %2 = vector.broadcast %cst_2 : f32 to vector<8x32xf32>
    %3 = arith.mulf %1, %2 : vector<8x32xf32>
    %c0_3 = arith.constant 0 : index
    %c0_4 = arith.constant 0 : index
    %c0_5 = arith.constant 0 : index
    %4 = vector.load %arg2[%c0_3, %c0_4, %c0_5] : memref<8x8x32xf32, #tpu.memory_space<vmem>>, vector<8x8x32xf32>
    %cst_6 = arith.constant dense<0.000000e+00> : vector<8x32xf32>
    %5 = vector.multi_reduction <add>, %4, %cst_6 [1] : vector<8x8x32xf32> to vector<8x32xf32>
    %cst_7 = arith.constant 1.250000e-01 : f32
    %6 = vector.broadcast %cst_7 : f32 to vector<8x32xf32>
    %7 = arith.mulf %5, %6 : vector<8x32xf32>
    %c0_8 = arith.constant 0 : index
    %c0_9 = arith.constant 0 : index
    %8 = vector.load %arg3[%c0_8, %c0_9] : memref<32x32xf32, #tpu.memory_space<vmem>>, vector<32x32xf32>
    %cst_10 = arith.constant dense<0.000000e+00> : vector<8x32xf32>
    %9 = tpu.matmul %3, %8, %cst_10 {dimension_numbers = #tpu.dot_dimension_numbers<[1], [0], [0], [1], [0, 0, 1, 1], [], []>} : vector<8x32xf32>, vector<32x32xf32>, vector<8x32xf32> -> vector<8x32xf32>
    %c0_11 = arith.constant 0 : index
    %c0_12 = arith.constant 0 : index
    %10 = vector.load %arg4[%c0_11, %c0_12] : memref<1x32xf32, #tpu.memory_space<vmem>>, vector<1x32xf32>
    %11 = vector.broadcast %10 : vector<1x32xf32> to vector<8x32xf32>
    %12 = arith.addf %9, %11 : vector<8x32xf32>
    %13 = arith.negf %12 : vector<8x32xf32>
    %14 = math.exp %13 : vector<8x32xf32>
    %cst_13 = arith.constant 1.000000e+00 : f32
    %15 = vector.broadcast %cst_13 : f32 to vector<8x32xf32>
    %16 = arith.addf %15, %14 : vector<8x32xf32>
    %17 = arith.divf %15, %16 : vector<8x32xf32>
    %c0_14 = arith.constant 0 : index
    %c0_15 = arith.constant 0 : index
    %18 = vector.load %arg5[%c0_14, %c0_15] : memref<32x32xf32, #tpu.memory_space<vmem>>, vector<32x32xf32>
    %cst_16 = arith.constant dense<0.000000e+00> : vector<8x32xf32>
    %19 = tpu.matmul %7, %18, %cst_16 {dimension_numbers = #tpu.dot_dimension_numbers<[1], [0], [0], [1], [0, 0, 1, 1], [], []>} : vector<8x32xf32>, vector<32x32xf32>, vector<8x32xf32> -> vector<8x32xf32>
    %c0_17 = arith.constant 0 : index
    %c0_18 = arith.constant 0 : index
    %20 = vector.load %arg6[%c0_17, %c0_18] : memref<1x32xf32, #tpu.memory_space<vmem>>, vector<1x32xf32>
    %21 = vector.broadcast %20 : vector<1x32xf32> to vector<8x32xf32>
    %22 = arith.addf %19, %21 : vector<8x32xf32>
    %23 = math.tanh %22 : vector<8x32xf32>
    %24 = arith.mulf %17, %23 : vector<8x32xf32>
    %c0_19 = arith.constant 0 : index
    %c0_20 = arith.constant 0 : index
    %25 = vector.load %arg7[%c0_19, %c0_20] : memref<8x32xf32, #tpu.memory_space<vmem>>, vector<8x32xf32>
    tpu.vector_store %arg7[%c0_19, %c0_20], %24 {strides = array<i32>} : memref<8x32xf32, #tpu.memory_space<vmem>>, vector<8x32xf32>,
    return
  }
  func.func @transform_0(%arg0: i32) -> (i32, i32, i32) {
    %c0_i32 = arith.constant 0 : i32
    %c0_i32_0 = arith.constant 0 : i32
    %c0_i32_1 = arith.constant 0 : i32
    return %arg0, %c0_i32, %c0_i32_0 : i32, i32, i32
  }
  func.func @transform_1(%arg0: i32) -> (i32, i32, i32) {
    %c0_i32 = arith.constant 0 : i32
    %c0_i32_0 = arith.constant 0 : i32
    %c0_i32_1 = arith.constant 0 : i32
    return %arg0, %c0_i32, %c0_i32_0 : i32, i32, i32
  }
  func.func @transform_2(%arg0: i32) -> (i32, i32) {
    %c0_i32 = arith.constant 0 : i32
    %c0_i32_0 = arith.constant 0 : i32
    %c0_i32_1 = arith.constant 0 : i32
    return %c0_i32, %c0_i32_0 : i32, i32
  }
  func.func @transform_3(%arg0: i32) -> (i32, i32) {
    %c0_i32 = arith.constant 0 : i32
    %c0_i32_0 = arith.constant 0 : i32
    %c0_i32_1 = arith.constant 0 : i32
    return %c0_i32, %c0_i32_0 : i32, i32
  }
  func.func @transform_4(%arg0: i32) -> (i32, i32) {
    %c0_i32 = arith.constant 0 : i32
    %c0_i32_0 = arith.constant 0 : i32
    %c0_i32_1 = arith.constant 0 : i32
    return %c0_i32, %c0_i32_0 : i32, i32
  }
  func.func @transform_5(%arg0: i32) -> (i32, i32) {
    %c0_i32 = arith.constant 0 : i32
    %c0_i32_0 = arith.constant 0 : i32
    %c0_i32_1 = arith.constant 0 : i32
    return %c0_i32, %c0_i32_0 : i32, i32
  }
  func.func @transform_6(%arg0: i32) -> (i32, i32) {
    %c0_i32 = arith.constant 0 : i32
    %c0_i32_0 = arith.constant 0 : i32
    return %arg0, %c0_i32 : i32, i32
  }
}

</mosaic_0001>

<llo_original>
// kernel: tpu_custom_call.1
$region0: #{tpu_custom_call.1}
  #allocation0 [shape = 'u32[]', space=smem, size = 0x4, offset = 0x4, fixed_abs, tag = 'smem constant byte address 0x4 - core index']
  #allocation1 [shape = 'u32[144,128]{1,0:T(1,128)}', space=vmem, size = 0x12000, scoped, tag = 'internal scratch']
  %s0 = inlined_call_operand.hbm [shape: f32[16,8,32], index: 0, kind: input, shape index: {}]
  %s1 = inlined_call_operand.hbm [shape: f32[16,8,32], index: 1, kind: input, shape index: {}]
  %s2 = inlined_call_operand.hbm [shape: f32[32,32], index: 2, kind: input, shape index: {}]
  %s3 = inlined_call_operand.vmem [shape: f32[1,32], index: 3, kind: input, shape index: {}]
  %s4 = inlined_call_operand.hbm [shape: f32[32,32], index: 4, kind: input, shape index: {}]
  %s5 = inlined_call_operand.vmem [shape: f32[1,32], index: 5, kind: input, shape index: {}]
  %s6 = inlined_call_operand.hbm [shape: f32[16,32], index: 6, kind: output, shape index: {}]
  %s7 = sld [smem:[#allocation0]]
  $region73: #{tpu_custom_call.1} parent=0
    _
  %s9 = ssub.s32 1, %s7
  %s10 = scalar_select 0, %s9, %s7
  $region1: #{tpu_custom_call.1} parent=0
    #allocation2 [shape = 'u8[65536]{0}', space=vmem, size = 0x10000, scoped, tag = 'input window, operand 0']
    #allocation3 [shape = 's32[2]{0}', space=sflag, size = 0x8, scoped, tag = 'scoped memory for tpu_custom_call.1']
    #allocation4 [shape = 's32[2]{0}', space=sflag, size = 0x8, scoped, tag = 'scoped memory for tpu_custom_call.1']
    #allocation5 [shape = 'u8[65536]{0}', space=vmem, size = 0x10000, scoped, tag = 'input window, operand 1']
    #allocation6 [shape = 's32[2]{0}', space=sflag, size = 0x8, scoped, tag = 'scoped memory for tpu_custom_call.1']
    #allocation7 [shape = 'u8[16384]{0}', space=vmem, size = 0x4000, scoped, tag = 'input window, operand 2, single buffered']
    #allocation8 [shape = 'u8[16384]{0}', space=vmem, size = 0x4000, scoped, tag = 'input window, operand 4, single buffered']
    #allocation9 [shape = 's32[1]{0}', space=sflag, size = 0x4, scoped, tag = 'scoped memory for tpu_custom_call.1']
    #allocation10 [shape = 'u8[8192]{0}', space=vmem, size = 0x2000, scoped, tag = 'output window, operand 0']
    %11 = vsyncpa [#allocation3], 0
    %s12 = scalar_lea.sflag [#allocation3], 1
    %13 = vsyncpa %s12, 0
    %14 = vsyncpa [#allocation6], 0
    %s15 = scalar_lea.sflag [#allocation6], 1
    %16 = vsyncpa %s15, 0
    %17 = vsyncpa [#allocation9], 0
    %18 = vsyncpa [#allocation4], 0
    %s19 = scalar_lea.sflag [#allocation4], 1
    %20 = vsyncpa %s19, 0
    loop: start=0, step=1, limit=4
    $region2: #{tpu_custom_call.1} parent=1 // loop_pre_header
      _
    $region3: #{tpu_custom_call.1} parent=1 // loop_header
      %s22 = sphi 0, %s26
      %p23 = scmp.ge.s32.totalorder %s22, 4
      %s32 = sphi 0, %s34
      %s35 = sphi 0, %s32
      %s36 = sphi 0, %s35
      %s52 = sphi 0, %s36
      %s58 = sphi 0, %s60
      %s61 = sphi 0, %s58
      %s62 = sphi 0, %s61
      %s78 = sphi 0, %s62
      %s82 = sphi 0, %s82
      %s84 = sphi 0, %s82
      %s85 = sphi 0, %s84
      %s99 = sphi 0, %s85
      %s103 = sphi 0, %s103
      %s105 = sphi 0, %s103
      %s106 = sphi 0, %s105
      %s120 = sphi 0, %s106
      %s124 = sphi 0, %s124
      %s126 = sphi 0, %s124
      %s127 = sphi 0, %s126
      %s141 = sphi 0, %s127
      %s145 = sphi 0, %s145
      %s147 = sphi 0, %s145
      %s148 = sphi 0, %s147
      %s162 = sphi 0, %s148
      %s168 = sphi 0, %s170
      %s171 = sphi 0, %s168
      %s172 = sphi 0, %s171
      %s188 = sphi 0, %s172
    $region4: #{tpu_custom_call.1} parent=1 // loop_header_branch
      %25 = sbr.rel (%p23) target = $region8
    $region5: #{tpu_custom_call.1} parent=1 // loop_body
      %s27 = ssub.s32 %s22, 1
      %s28 = ssub.s32 %s22, 2
      %s29 = sadd.s32 %s22, 1
      %s30 = ssub.s32 %s22, %s29
      %p31 = scmp.eq.s32.totalorder %s30, 0
      %s33 = sadd.s32 %s32, 1
      %s34 = scalar_select %p31, %s32, %s33
      %p37 = pneg %p31
      %p38 = scmp.eq.s32.totalorder %s22, 1
      %p39 = por %p37, %p38
      %p40 = scmp.ne.s32.totalorder %s32, %s35
      %p41 = scmp.eq.s32.totalorder %s22, 0
      %p42 = por %p40, %p41
      %p43 = scmp.ne.s32.totalorder %s32, %s35
      %p44 = scmp.eq.s32.totalorder %s27, 1
      %p45 = por %p43, %p44
      %p46 = scmp.ne.s32.totalorder %s35, %s36
      %p47 = scmp.eq.s32.totalorder %s27, 0
      %p48 = por %p46, %p47
      %p49 = scmp.ne.s32.totalorder %s35, %s36
      %p50 = scmp.eq.s32.totalorder %s28, 1
      %p51 = por %p49, %p50
      %p53 = scmp.ne.s32.totalorder %s36, %s52
      %p54 = scmp.eq.s32.totalorder %s28, 0
      %p55 = por %p53, %p54
      %s56 = ssub.s32 %s22, %s29
      %p57 = scmp.eq.s32.totalorder %s56, 0
      %s59 = sadd.s32 %s58, 1
      %s60 = scalar_select %p57, %s58, %s59
      %p63 = pneg %p57
      %p64 = scmp.eq.s32.totalorder %s22, 1
      %p65 = por %p63, %p64
      %p66 = scmp.ne.s32.totalorder %s58, %s61
      %p67 = scmp.eq.s32.totalorder %s22, 0
      %p68 = por %p66, %p67
      %p69 = scmp.ne.s32.totalorder %s58, %s61
      %p70 = scmp.eq.s32.totalorder %s27, 1
      %p71 = por %p69, %p70
      %p72 = scmp.ne.s32.totalorder %s61, %s62
      %p73 = scmp.eq.s32.totalorder %s27, 0
      %p74 = por %p72, %p73
      %p75 = scmp.ne.s32.totalorder %s61, %s62
      %p76 = scmp.eq.s32.totalorder %s28, 1
      %p77 = por %p75, %p76
      %p79 = scmp.ne.s32.totalorder %s62, %s78
      %p80 = scmp.eq.s32.totalorder %s28, 0
      %p81 = por %p79, %p80
      %s83 = sadd.s32 %s82, 1
      %p86 = scmp.eq.s32.totalorder %s22, 1
      %p87 = scmp.ne.s32.totalorder %s82, %s84
      %p88 = scmp.eq.s32.totalorder %s22, 0
      %p89 = por %p87, %p88
      %p90 = scmp.ne.s32.totalorder %s82, %s84
      %p91 = scmp.eq.s32.totalorder %s27, 1
      %p92 = por %p90, %p91
      %p93 = scmp.ne.s32.totalorder %s84, %s85
      %p94 = scmp.eq.s32.totalorder %s27, 0
      %p95 = por %p93, %p94
      %p96 = scmp.ne.s32.totalorder %s84, %s85
      %p97 = scmp.eq.s32.totalorder %s28, 1
      %p98 = por %p96, %p97
      %p100 = scmp.ne.s32.totalorder %s85, %s99
      %p101 = scmp.eq.s32.totalorder %s28, 0
      %p102 = por %p100, %p101
      %s104 = sadd.s32 %s103, 1
      %p107 = scmp.eq.s32.totalorder %s22, 1
      %p108 = scmp.ne.s32.totalorder %s103, %s105
      %p109 = scmp.eq.s32.totalorder %s22, 0
      %p110 = por %p108, %p109
      %p111 = scmp.ne.s32.totalorder %s103, %s105
      %p112 = scmp.eq.s32.totalorder %s27, 1
      %p113 = por %p111, %p112
      %p114 = scmp.ne.s32.totalorder %s105, %s106
      %p115 = scmp.eq.s32.totalorder %s27, 0
      %p116 = por %p114, %p115
      %p117 = scmp.ne.s32.totalorder %s105, %s106
      %p118 = scmp.eq.s32.totalorder %s28, 1
      %p119 = por %p117, %p118
      %p121 = scmp.ne.s32.totalorder %s106, %s120
      %p122 = scmp.eq.s32.totalorder %s28, 0
      %p123 = por %p121, %p122
      %s125 = sadd.s32 %s124, 1
      %p128 = scmp.eq.s32.totalorder %s22, 1
      %p129 = scmp.ne.s32.totalorder %s124, %s126
      %p130 = scmp.eq.s32.totalorder %s22, 0
      %p131 = por %p129, %p130
      %p132 = scmp.ne.s32.totalorder %s124, %s126
      %p133 = scmp.eq.s32.totalorder %s27, 1
      %p134 = por %p132, %p133
      %p135 = scmp.ne.s32.totalorder %s126, %s127
      %p136 = scmp.eq.s32.totalorder %s27, 0
      %p137 = por %p135, %p136
      %p138 = scmp.ne.s32.totalorder %s126, %s127
      %p139 = scmp.eq.s32.totalorder %s28, 1
      %p140 = por %p138, %p139
      %p142 = scmp.ne.s32.totalorder %s127, %s141
      %p143 = scmp.eq.s32.totalorder %s28, 0
      %p144 = por %p142, %p143
      %s146 = sadd.s32 %s145, 1
      %p149 = scmp.eq.s32.totalorder %s22, 1
      %p150 = scmp.ne.s32.totalorder %s145, %s147
      %p151 = scmp.eq.s32.totalorder %s22, 0
      %p152 = por %p150, %p151
      %p153 = scmp.ne.s32.totalorder %s145, %s147
      %p154 = scmp.eq.s32.totalorder %s27, 1
      %p155 = por %p153, %p154
      %p156 = scmp.ne.s32.totalorder %s147, %s148
      %p157 = scmp.eq.s32.totalorder %s27, 0
      %p158 = por %p156, %p157
      %p159 = scmp.ne.s32.totalorder %s147, %s148
      %p160 = scmp.eq.s32.totalorder %s28, 1
      %p161 = por %p159, %p160
      %p163 = scmp.ne.s32.totalorder %s148, %s162
      %p164 = scmp.eq.s32.totalorder %s28, 0
      %p165 = por %p163, %p164
      %s166 = ssub.s32 %s22, %s29
      %p167 = scmp.eq.s32.totalorder %s166, 0
      %s169 = sadd.s32 %s168, 1
      %s170 = scalar_select %p167, %s168, %s169
      %p173 = pneg %p167
      %p174 = scmp.eq.s32.totalorder %s22, 1
      %p175 = por %p173, %p174
      %p176 = scmp.ne.s32.totalorder %s168, %s171
      %p177 = scmp.eq.s32.totalorder %s22, 0
      %p178 = por %p176, %p177
      %p179 = scmp.ne.s32.totalorder %s168, %s171
      %p180 = scmp.eq.s32.totalorder %s27, 1
      %p181 = por %p179, %p180
      %p182 = scmp.ne.s32.totalorder %s171, %s172
      %p183 = scmp.eq.s32.totalorder %s27, 0
      %p184 = por %p182, %p183
      %p185 = scmp.ne.s32.totalorder %s171, %s172
      %p186 = scmp.eq.s32.totalorder %s28, 1
      %p187 = por %p185, %p186
      %p189 = scmp.ne.s32.totalorder %s172, %s188
      %p190 = scmp.eq.s32.totalorder %s28, 0
      %p191 = por %p189, %p190
      %p192 = scmp.le.s32.totalorder 1, %s22
      %p193 = scmp.lt.s32.totalorder %s22, 3
      %p194 = pnand %p192, %p193
      %p195 = pneg %p194
      // Predicated region
      $region9: #{tpu_custom_call.1} parent=5 // pred_check
        _
      $region10: #{tpu_custom_call.1} parent=5 // pred_check_branch
        %197 = sbr.rel (%p194) target = $region12
      $region11: #{tpu_custom_call.1} parent=5 // pred_region
        %s198 = ssub.s32 %s22, 1
        // Predicated region
        $region13: #{tpu_custom_call.1} parent=11 // pred_check
          %p199 = pneg %p95
        $region14: #{tpu_custom_call.1} parent=11 // pred_check_branch
          %201 = sbr.rel (%p199) target = $region16
        $region15: #{tpu_custom_call.1} parent=11 // pred_region
          %s203 = ssub.s32 512, 512
          %204 = vsyncadd [#allocation6], %s203
          %s205 = sshll.u32 [#allocation7], 4
          %s206 = int_to_ptr.vmem [resolvable:$true] %s205
          %211 = dma.hbm_to_vmem [thread:$0]  %s2, 512, %s206, [#allocation6], 128, 128, 8
        $region16: #{tpu_custom_call.1} parent=11 // pred_fallthru
          _
        // Predicated region
        $region17: #{tpu_custom_call.1} parent=11 // pred_check
          %p212 = pneg %p116
        $region18: #{tpu_custom_call.1} parent=11 // pred_check_branch
          %214 = sbr.rel (%p212) target = $region20
        $region19: #{tpu_custom_call.1} parent=11 // pred_region
          _
        $region20: #{tpu_custom_call.1} parent=11 // pred_fallthru
          _
        // Predicated region
        $region21: #{tpu_custom_call.1} parent=11 // pred_check
          %p215 = pneg %p137
        $region22: #{tpu_custom_call.1} parent=11 // pred_check_branch
          %217 = sbr.rel (%p215) target = $region24
        $region23: #{tpu_custom_call.1} parent=11 // pred_region
          %s219 = ssub.s32 512, 512
          %220 = vsyncadd [#allocation9], %s219
          %s221 = sshll.u32 [#allocation8], 4
          %s222 = int_to_ptr.vmem [resolvable:$true] %s221
          %227 = dma.hbm_to_vmem [thread:$0]  %s4, 512, %s222, [#allocation9], 128, 128, 8
        $region24: #{tpu_custom_call.1} parent=11 // pred_fallthru
          _
        // Predicated region
        $region25: #{tpu_custom_call.1} parent=11 // pred_check
          %p228 = pneg %p158
        $region26: #{tpu_custom_call.1} parent=11 // pred_check_branch
          %230 = sbr.rel (%p228) target = $region28
        $region27: #{tpu_custom_call.1} parent=11 // pred_region
          _
        $region28: #{tpu_custom_call.1} parent=11 // pred_fallthru
          _
      $region12: #{tpu_custom_call.1} parent=5 // pred_fallthru
        _
      %p231 = scmp.lt.s32.totalorder %s22, 2
      // Predicated region
      $region29: #{tpu_custom_call.1} parent=5 // pred_check
        %p232 = pneg %p231
      $region30: #{tpu_custom_call.1} parent=5 // pred_check_branch
        %234 = sbr.rel (%p232) target = $region32
      $region31: #{tpu_custom_call.1} parent=5 // pred_region
        // Predicated region
        $region33: #{tpu_custom_call.1} parent=31 // pred_check
          %p235 = pneg %p42
        $region34: #{tpu_custom_call.1} parent=31 // pred_check_branch
          %237 = sbr.rel (%p235) target = $region36
        $region35: #{tpu_custom_call.1} parent=31 // pred_region
          %s238 = sand.u32 %s32, 1
          %s239 = scalar_lea.sflag [#allocation3], %s238
          %s240 = sand.u32 %s32, 1
          %s241 = smul.addr %s240, 64
          %s242 = scalar_lea.vmem [#allocation2], %s241
          %s243 = smul.u32 8, %s22
          %s245 = ssub.s32 1024, 1024
          %246 = vsyncadd %s239, %s245
          %s247 = smul.addr %s243, 128
          %s248 = scalar_lea.hbm %s0, %s247
          %s249 = sshll.u32 %s242, 4
          %s250 = int_to_ptr.vmem [resolvable:$true] %s249
          %255 = dma.hbm_to_vmem [thread:$0]  %s248, 1024, %s250, %s239, 128, 128, 8
        $region36: #{tpu_custom_call.1} parent=31 // pred_fallthru
          _
        // Predicated region
        $region37: #{tpu_custom_call.1} parent=31 // pred_check
          %p256 = pneg %p68
        $region38: #{tpu_custom_call.1} parent=31 // pred_check_branch
          %258 = sbr.rel (%p256) target = $region40
        $region39: #{tpu_custom_call.1} parent=31 // pred_region
          %s259 = sand.u32 %s22, 1
          %s260 = scalar_lea.sflag [#allocation6], %s259
          %s261 = sand.u32 %s58, 1
          %s262 = smul.addr %s261, 64
          %s263 = scalar_lea.vmem [#allocation5], %s262
          %s264 = smul.u32 8, %s22
          %s266 = ssub.s32 1024, 1024
          %267 = vsyncadd %s260, %s266
          %s268 = smul.addr %s264, 128
          %s269 = scalar_lea.hbm %s1, %s268
          %s270 = sshll.u32 %s263, 4
          %s271 = int_to_ptr.vmem [resolvable:$true] %s270
          %276 = dma.hbm_to_vmem [thread:$0]  %s269, 1024, %s271, %s260, 128, 128, 8
        $region40: #{tpu_custom_call.1} parent=31 // pred_fallthru
          _
      $region32: #{tpu_custom_call.1} parent=5 // pred_fallthru
        _
      %p277 = scmp.le.s32.totalorder 1, %s22
      %p278 = scmp.lt.s32.totalorder %s22, 3
      %p279 = pnand %p277, %p278
      %p280 = pneg %p279
      // Predicated region
      $region41: #{tpu_custom_call.1} parent=5 // pred_check
        _
      $region42: #{tpu_custom_call.1} parent=5 // pred_check_branch
        %282 = sbr.rel (%p279) target = $region44
      $region43: #{tpu_custom_call.1} parent=5 // pred_region
        %s283 = ssub.s32 %s22, 1
        %s284 = sand.u32 %s35, 1
        %s285 = scalar_lea.sflag [#allocation3], %s284
        %s286 = sand.u32 %s35, 1
        %s287 = smul.addr %s286, 64
        %s288 = scalar_lea.vmem [#allocation2], %s287
        // Predicated region
        $region45: #{tpu_custom_call.1} parent=43 // pred_check
          %p289 = pneg %p48
        $region46: #{tpu_custom_call.1} parent=43 // pred_check_branch
          %291 = sbr.rel (%p289) target = $region48
        $region47: #{tpu_custom_call.1} parent=43 // pred_region
          %292 = dma.done %s285, 1024
        $region48: #{tpu_custom_call.1} parent=43 // pred_fallthru
          _
        %s293 = sand.u32 %s27, 1
        %s294 = scalar_lea.sflag [#allocation6], %s293
        %s295 = sand.u32 %s61, 1
        %s296 = smul.addr %s295, 64
        %s297 = scalar_lea.vmem [#allocation5], %s296
        // Predicated region
        $region49: #{tpu_custom_call.1} parent=43 // pred_check
          %p298 = pneg %p74
        $region50: #{tpu_custom_call.1} parent=43 // pred_check_branch
          %300 = sbr.rel (%p298) target = $region52
        $region51: #{tpu_custom_call.1} parent=43 // pred_region
          %301 = dma.done %s294, 1024
        $region52: #{tpu_custom_call.1} parent=43 // pred_fallthru
          _
        // Predicated region
        $region53: #{tpu_custom_call.1} parent=43 // pred_check
          %p302 = pneg %p95
        $region54: #{tpu_custom_call.1} parent=43 // pred_check_branch
          %304 = sbr.rel (%p302) target = $region56
        $region55: #{tpu_custom_call.1} parent=43 // pred_region
          %305 = dma.done [#allocation6], 512
        $region56: #{tpu_custom_call.1} parent=43 // pred_fallthru
          _
        // Predicated region
        $region57: #{tpu_custom_call.1} parent=43 // pred_check
          %p306 = pneg %p137
        $region58: #{tpu_custom_call.1} parent=43 // pred_check_branch
          %308 = sbr.rel (%p306) target = $region60
        $region59: #{tpu_custom_call.1} parent=43 // pred_region
          %309 = dma.done [#allocation9], 512
        $region60: #{tpu_custom_call.1} parent=43 // pred_fallthru
          _
        %s310 = sand.u32 %s35, 1
        %s311 = scalar_lea.sflag [#allocation3], %s310
        %s312 = sand.u32 %s35, 1
        %s313 = smul.addr %s312, 64
        %s314 = scalar_lea.vmem [#allocation2], %s313
        %p315 = pneg %p48
        %p316 = pneg %p45
        %s317 = sand.u32 %s27, 1
        %s318 = scalar_lea.sflag [#allocation6], %s317
        %s319 = sand.u32 %s61, 1
        %s320 = smul.addr %s319, 64
        %s321 = scalar_lea.vmem [#allocation5], %s320
        %p322 = pneg %p74
        %p323 = pneg %p71
        %p324 = pneg %p95
        %p325 = pneg %p92
        %p326 = pneg %p116
        %p327 = pneg %p113
        %p328 = pneg %p137
        %p329 = pneg %p134
        %p330 = pneg %p158
        %p331 = pneg %p155
        %p332 = pneg %p184
        %p333 = pneg %p181
        %s334 = sand.u32 %s171, 1
        %s335 = scalar_lea.sflag [#allocation4], %s334
        %s336 = sand.u32 %s171, 1
        %s337 = smul.addr %s336, 8
        %s338 = scalar_lea.vmem [#allocation10], %s337
        %s339 = smul.u32 8, %s27
        %s340 = smul.u32 8, %s27
        %v341 = vld [vmem:[%s288] sm:$0xff]
        %v342 = vld [vmem:[%s288 + $0x8] sm:$0xff]
        %v343 = vld [vmem:[%s288 + $0x10] sm:$0xff]
        %v344 = vld [vmem:[%s288 + $0x18] sm:$0xff]
        %v345 = vld [vmem:[%s288 + $0x20] sm:$0xff]
        %v346 = vld [vmem:[%s288 + $0x28] sm:$0xff]
        %v347 = vld [vmem:[%s288 + $0x30] sm:$0xff]
        %v348 = vld [vmem:[%s288 + $0x38] sm:$0xff]
        %vm349 = vcmask 261120
        %v350 = vsel %vm349, %v341, 0.0
        %v351 = vrot.slane %v350, 4
        %v352 = vadd.f32 %v350, %v351
        %v353 = vrot.slane %v352, 2
        %v354 = vadd.f32 %v352, %v353
        %v355 = vrot.slane %v354, 1
        %v356 = vadd.f32 %v354, %v355
        %v357 = vsel %vm349, %v342, 0.0
        %v358 = vrot.slane %v357, 4
        %v359 = vadd.f32 %v357, %v358
        %v360 = vrot.slane %v359, 2
        %v361 = vadd.f32 %v359, %v360
        %v362 = vrot.slane %v361, 1
        %v363 = vadd.f32 %v361, %v362
        %v364 = vsel %vm349, %v343, 0.0
        %v365 = vrot.slane %v364, 4
        %v366 = vadd.f32 %v364, %v365
        %v367 = vrot.slane %v366, 2
        %v368 = vadd.f32 %v366, %v367
        %v369 = vrot.slane %v368, 1
        %v370 = vadd.f32 %v368, %v369
        %v371 = vsel %vm349, %v344, 0.0
        %v372 = vrot.slane %v371, 4
        %v373 = vadd.f32 %v371, %v372
        %v374 = vrot.slane %v373, 2
        %v375 = vadd.f32 %v373, %v374
        %v376 = vrot.slane %v375, 1
        %v377 = vadd.f32 %v375, %v376
        %v378 = vsel %vm349, %v345, 0.0
        %v379 = vrot.slane %v378, 4
        %v380 = vadd.f32 %v378, %v379
        %v381 = vrot.slane %v380, 2
        %v382 = vadd.f32 %v380, %v381
        %v383 = vrot.slane %v382, 1
        %v384 = vadd.f32 %v382, %v383
        %v385 = vsel %vm349, %v346, 0.0
        %v386 = vrot.slane %v385, 4
        %v387 = vadd.f32 %v385, %v386
        %v388 = vrot.slane %v387, 2
        %v389 = vadd.f32 %v387, %v388
        %v390 = vrot.slane %v389, 1
        %v391 = vadd.f32 %v389, %v390
        %v392 = vsel %vm349, %v347, 0.0
        %v393 = vrot.slane %v392, 4
        %v394 = vadd.f32 %v392, %v393
        %v395 = vrot.slane %v394, 2
        %v396 = vadd.f32 %v394, %v395
        %v397 = vrot.slane %v396, 1
        %v398 = vadd.f32 %v396, %v397
        %v399 = vsel %vm349, %v348, 0.0
        %v400 = vrot.slane %v399, 4
        %v401 = vadd.f32 %v399, %v400
        %v402 = vrot.slane %v401, 2
        %v403 = vadd.f32 %v401, %v402
        %v404 = vrot.slane %v403, 1
        %v405 = vadd.f32 %v403, %v404
        %v406 = vmul.f32 %v356, 0.125
        %v407 = vmul.f32 %v363, 0.125
        %v408 = vmul.f32 %v370, 0.125
        %v409 = vmul.f32 %v377, 0.125
        %v410 = vmul.f32 %v384, 0.125
        %v411 = vmul.f32 %v391, 0.125
        %v412 = vmul.f32 %v398, 0.125
        %v413 = vmul.f32 %v405, 0.125
        %v414 = vld [vmem:[%s297] sm:$0xff]
        %v415 = vld [vmem:[%s297 + $0x8] sm:$0xff]
        %v416 = vld [vmem:[%s297 + $0x10] sm:$0xff]
        %v417 = vld [vmem:[%s297 + $0x18] sm:$0xff]
        %v418 = vld [vmem:[%s297 + $0x20] sm:$0xff]
        %v419 = vld [vmem:[%s297 + $0x28] sm:$0xff]
        %v420 = vld [vmem:[%s297 + $0x30] sm:$0xff]
        %v421 = vld [vmem:[%s297 + $0x38] sm:$0xff]
        %v422 = vsel %vm349, %v414, 0.0
        %v423 = vrot.slane %v422, 4
        %v424 = vadd.f32 %v422, %v423
        %v425 = vrot.slane %v424, 2
        %v426 = vadd.f32 %v424, %v425
        %v427 = vrot.slane %v426, 1
        %v428 = vadd.f32 %v426, %v427
        %v429 = vsel %vm349, %v415, 0.0
        %v430 = vrot.slane %v429, 4
        %v431 = vadd.f32 %v429, %v430
        %v432 = vrot.slane %v431, 2
        %v433 = vadd.f32 %v431, %v432
        %v434 = vrot.slane %v433, 1
        %v435 = vadd.f32 %v433, %v434
        %v436 = vsel %vm349, %v416, 0.0
        %v437 = vrot.slane %v436, 4
        %v438 = vadd.f32 %v436, %v437
        %v439 = vrot.slane %v438, 2
        %v440 = vadd.f32 %v438, %v439
        %v441 = vrot.slane %v440, 1
        %v442 = vadd.f32 %v440, %v441
        %v443 = vsel %vm349, %v417, 0.0
        %v444 = vrot.slane %v443, 4
        %v445 = vadd.f32 %v443, %v444
        %v446 = vrot.slane %v445, 2
        %v447 = vadd.f32 %v445, %v446
        %v448 = vrot.slane %v447, 1
        %v449 = vadd.f32 %v447, %v448
        %v450 = vsel %vm349, %v418, 0.0
        %v451 = vrot.slane %v450, 4
        %v452 = vadd.f32 %v450, %v451
        %v453 = vrot.slane %v452, 2
        %v454 = vadd.f32 %v452, %v453
        %v455 = vrot.slane %v454, 1
        %v456 = vadd.f32 %v454, %v455
        %v457 = vsel %vm349, %v419, 0.0
        %v458 = vrot.slane %v457, 4
        %v459 = vadd.f32 %v457, %v458
        %v460 = vrot.slane %v459, 2
        %v461 = vadd.f32 %v459, %v460
        %v462 = vrot.slane %v461, 1
        %v463 = vadd.f32 %v461, %v462
        %v464 = vsel %vm349, %v420, 0.0
        %v465 = vrot.slane %v464, 4
        %v466 = vadd.f32 %v464, %v465
        %v467 = vrot.slane %v466, 2
        %v468 = vadd.f32 %v466, %v467
        %v469 = vrot.slane %v468, 1
        %v470 = vadd.f32 %v468, %v469
        %v471 = vsel %vm349, %v421, 0.0
        %v472 = vrot.slane %v471, 4
        %v473 = vadd.f32 %v471, %v472
        %v474 = vrot.slane %v473, 2
        %v475 = vadd.f32 %v473, %v474
        %v476 = vrot.slane %v475, 1
        %v477 = vadd.f32 %v475, %v476
        %v478 = vmul.f32 %v428, 0.125
        %v479 = vmul.f32 %v435, 0.125
        %v480 = vmul.f32 %v442, 0.125
        %v481 = vmul.f32 %v449, 0.125
        %v482 = vmul.f32 %v456, 0.125
        %v483 = vmul.f32 %v463, 0.125
        %v484 = vmul.f32 %v470, 0.125
        %v485 = vmul.f32 %v477, 0.125
        %v486 = vld [vmem:[#allocation7] sm:$0xff]
        %v487 = vld [vmem:[#allocation7 + $0x8] sm:$0xff]
        %v488 = vld [vmem:[#allocation7 + $0x10] sm:$0xff]
        %v489 = vld [vmem:[#allocation7 + $0x18] sm:$0xff]
        %v490 = vld [vmem:[%s3] sm:$0x1]
        %v492 = vlaneseq
        %v493 = vshrl.u32 %v492, 7
        %v494 = vsub.s32 0, %v493
        %v495 = vrot.slane %v490, %v494
        %vm505 = vcmask 1041409
        %v506 = vsel %vm505, %v407, %v406
        %vm507 = vcmask 1042434
        %v508 = vsel %vm507, %v408, %v506
        %vm509 = vcmask 1043459
        %v510 = vsel %vm509, %v409, %v508
        %vm511 = vcmask 1044484
        %v512 = vsel %vm511, %v410, %v510
        %vm513 = vcmask 1045509
        %v514 = vsel %vm513, %v411, %v512
        %vm515 = vcmask 1046534
        %v516 = vsel %vm515, %v412, %v514
        %vm517 = vcmask 1047559
        %v518 = vsel %vm517, %v413, %v516
        %v519 = vsel %vm349, %v518, 0
        %521 = vmatprep.subr.mxu0 0.0
        %522 = vmatpush1.msra.mxu0 %v486
        %523 = vmatprep.subr.mxu0 0.0
        %524 = vmatpush1.msra.mxu0 %v487
        %525 = vmatprep.subr.mxu0 0.0
        %526 = vmatpush1.msra.mxu0 %v488
        %527 = vmatprep.subr.mxu0 0.0
        %528 = vmatpush1.msra.mxu0 %v489
        %529 = vmatprep.subr.mxu0 0.0
        %530 = vmatpush1.msra.mxu0 0.0
        %531 = vmatprep.subr.mxu0 0.0
        %532 = vmatpush1.msra.mxu0 0.0
        %533 = vmatprep.subr.mxu0 0.0
        %534 = vmatpush1.msra.mxu0 0.0
        %535 = vmatprep.subr.mxu0 0.0
        %536 = vmatpush1.msra.mxu0 0.0
        %537 = vmatprep.subr.mxu0 0.0
        %538 = vmatpush1.msra.mxu0 0.0
        %539 = vmatprep.subr.mxu0 0.0
        %540 = vmatpush1.msra.mxu0 0.0
        %541 = vmatprep.subr.mxu0 0.0
        %542 = vmatpush1.msra.mxu0 0.0
        %543 = vmatprep.subr.mxu0 0.0
        %544 = vmatpush1.msra.mxu0 0.0
        %545 = vmatprep.subr.mxu0 0.0
        %546 = vmatpush1.msra.mxu0 0.0
        %547 = vmatprep.subr.mxu0 0.0
        %548 = vmatpush1.msra.mxu0 0.0
        %549 = vmatprep.subr.mxu0 0.0
        %550 = vmatpush1.msra.mxu0 0.0
        %551 = vmatprep.subr.mxu0 0.0
        %552 = vmatpush1.msra.mxu0 0.0
        %553 = vmatprep.subr.mxu0 0.0
        %554 = vmatpush1.msra.mxu0 0.0
        %555 = vmatprep.subr.mxu0 0.0
        %556 = vmatpush1.msra.mxu0 0.0
        %557 = vmatprep.subr.mxu0 0.0
        %558 = vmatpush1.msra.mxu0 0.0
        %559 = vmatprep.subr.mxu0 0.0
        %560 = vmatpush1.msra.mxu0 0.0
        %561 = vmatprep.subr.mxu0 0.0
        %562 = vmatpush1.msra.mxu0 0.0
        %563 = vmatprep.subr.mxu0 0.0
        %564 = vmatpush1.msra.mxu0 0.0
        %565 = vmatprep.subr.mxu0 0.0
        %566 = vmatpush1.msra.mxu0 0.0
        %567 = vmatprep.subr.mxu0 0.0
        %568 = vmatpush1.msra.mxu0 0.0
        %569 = vmatprep.subr.mxu0 0.0
        %570 = vmatpush1.msra.mxu0 0.0
        %571 = vmatprep.subr.mxu0 0.0
        %572 = vmatpush1.msra.mxu0 0.0
        %573 = vmatprep.subr.mxu0 0.0
        %574 = vmatpush1.msra.mxu0 0.0
        %575 = vmatprep.subr.mxu0 0.0
        %576 = vmatpush1.msra.mxu0 0.0
        %577 = vmatprep.subr.mxu0 0.0
        %578 = vmatpush1.msra.mxu0 0.0
        %579 = vmatprep.subr.mxu0 0.0
        %580 = vmatpush1.msra.mxu0 0.0
        %581 = vmatprep.subr.mxu0 0.0
        %582 = vmatpush1.msra.mxu0 0.0
        %583 = vmatprep.subr.mxu0 0.0
        %584 = vmatpush1.msra.mxu0 0.0
        %585 = vmatprep.mubr.f32.mxu0 0.0
        %586 = vmatmul.mubr.f32.gmra.mrb[0].mxu0 %v519
        %v587 = vpop.f32.mrb[0].mxu0
        %v588 = vadd.f32 %v495, %v587
        %v589 = vpop.f32.mrb[0].mxu0
        %590 = vdwg.mxu0
        %v591 = vxor.u32 %v588, 2147483648
        %v592 = vmul.f32 %v591, 1.442695
        %v593 = vpow.pop %v592
        %v594 = vadd.f32 %v593, 1.0
        %v595 = vrcp.pop %v594
        %v596 = vmul.f32 1.0, %v595
        %v597 = vld [vmem:[#allocation8] sm:$0xff]
        %v598 = vld [vmem:[#allocation8 + $0x8] sm:$0xff]
        %v599 = vld [vmem:[#allocation8 + $0x10] sm:$0xff]
        %v600 = vld [vmem:[#allocation8 + $0x18] sm:$0xff]
        %v601 = vld [vmem:[%s5] sm:$0x1]
        %v603 = vlaneseq
        %v604 = vshrl.u32 %v603, 7
        %v605 = vsub.s32 0, %v604
        %v606 = vrot.slane %v601, %v605
        %v616 = vsel %vm505, %v479, %v478
        %v617 = vsel %vm507, %v480, %v616
        %v618 = vsel %vm509, %v481, %v617
        %v619 = vsel %vm511, %v482, %v618
        %v620 = vsel %vm513, %v483, %v619
        %v621 = vsel %vm515, %v484, %v620
        %v622 = vsel %vm517, %v485, %v621
        %v623 = vsel %vm349, %v622, 0
        %625 = vmatprep.subr.mxu0 0.0
        %626 = vmatpush1.msra.mxu0 %v597
        %627 = vmatprep.subr.mxu0 0.0
        %628 = vmatpush1.msra.mxu0 %v598
        %629 = vmatprep.subr.mxu0 0.0
        %630 = vmatpush1.msra.mxu0 %v599
        %631 = vmatprep.subr.mxu0 0.0
        %632 = vmatpush1.msra.mxu0 %v600
        %633 = vmatprep.subr.mxu0 0.0
        %634 = vmatpush1.msra.mxu0 0.0
        %635 = vmatprep.subr.mxu0 0.0
        %636 = vmatpush1.msra.mxu0 0.0
        %637 = vmatprep.subr.mxu0 0.0
        %638 = vmatpush1.msra.mxu0 0.0
        %639 = vmatprep.subr.mxu0 0.0
        %640 = vmatpush1.msra.mxu0 0.0
        %641 = vmatprep.subr.mxu0 0.0
        %642 = vmatpush1.msra.mxu0 0.0
        %643 = vmatprep.subr.mxu0 0.0
        %644 = vmatpush1.msra.mxu0 0.0
        %645 = vmatprep.subr.mxu0 0.0
        %646 = vmatpush1.msra.mxu0 0.0
        %647 = vmatprep.subr.mxu0 0.0
        %648 = vmatpush1.msra.mxu0 0.0
        %649 = vmatprep.subr.mxu0 0.0
        %650 = vmatpush1.msra.mxu0 0.0
        %651 = vmatprep.subr.mxu0 0.0
        %652 = vmatpush1.msra.mxu0 0.0
        %653 = vmatprep.subr.mxu0 0.0
        %654 = vmatpush1.msra.mxu0 0.0
        %655 = vmatprep.subr.mxu0 0.0
        %656 = vmatpush1.msra.mxu0 0.0
        %657 = vmatprep.subr.mxu0 0.0
        %658 = vmatpush1.msra.mxu0 0.0
        %659 = vmatprep.subr.mxu0 0.0
        %660 = vmatpush1.msra.mxu0 0.0
        %661 = vmatprep.subr.mxu0 0.0
        %662 = vmatpush1.msra.mxu0 0.0
        %663 = vmatprep.subr.mxu0 0.0
        %664 = vmatpush1.msra.mxu0 0.0
        %665 = vmatprep.subr.mxu0 0.0
        %666 = vmatpush1.msra.mxu0 0.0
        %667 = vmatprep.subr.mxu0 0.0
        %668 = vmatpush1.msra.mxu0 0.0
        %669 = vmatprep.subr.mxu0 0.0
        %670 = vmatpush1.msra.mxu0 0.0
        %671 = vmatprep.subr.mxu0 0.0
        %672 = vmatpush1.msra.mxu0 0.0
        %673 = vmatprep.subr.mxu0 0.0
        %674 = vmatpush1.msra.mxu0 0.0
        %675 = vmatprep.subr.mxu0 0.0
        %676 = vmatpush1.msra.mxu0 0.0
        %677 = vmatprep.subr.mxu0 0.0
        %678 = vmatpush1.msra.mxu0 0.0
        %679 = vmatprep.subr.mxu0 0.0
        %680 = vmatpush1.msra.mxu0 0.0
        %681 = vmatprep.subr.mxu0 0.0
        %682 = vmatpush1.msra.mxu0 0.0
        %683 = vmatprep.subr.mxu0 0.0
        %684 = vmatpush1.msra.mxu0 0.0
        %685 = vmatprep.subr.mxu0 0.0
        %686 = vmatpush1.msra.mxu0 0.0
        %687 = vmatprep.subr.mxu0 0.0
        %688 = vmatpush1.msra.mxu0 0.0
        %689 = vmatprep.mubr.f32.mxu0 0.0
        %690 = vmatmul.mubr.f32.gmra.mrb[0].mxu0 %v623
        %v691 = vpop.f32.mrb[0].mxu0
        %v692 = vadd.f32 %v606, %v691
        %v693 = vpop.f32.mrb[0].mxu0
        %694 = vdwg.mxu0
        %v695 = vtanh.pop %v692
        %v696 = vmul.f32 %v596, %v695
        %697 = vst.msk [vmem:[%s338] sm:$0xff] %vm349, %v696
        %s698 = sand.u32 %s171, 1
        %s699 = scalar_lea.sflag [#allocation4], %s698
        %s700 = sand.u32 %s171, 1
        %s701 = smul.addr %s700, 8
        %s702 = scalar_lea.vmem [#allocation10], %s701
        // Predicated region
        $region61: #{tpu_custom_call.1} parent=43 // pred_check
          %p703 = pneg %p181
        $region62: #{tpu_custom_call.1} parent=43 // pred_check_branch
          %705 = sbr.rel (%p703) target = $region64
        $region63: #{tpu_custom_call.1} parent=43 // pred_region
          %s707 = ssub.s32 128, 128
          %708 = vsyncadd %s699, %s707
          %s709 = smul.addr %s27, 128
          %s710 = scalar_lea.hbm %s6, %s709
          %s712 = sshll.u32 %s702, 4
          %s713 = int_to_ptr.vmem [resolvable:$true] %s712
          %715 = dma.vmem_to_hbm [thread:$0]  %s713, 128, %s710, %s699
        $region64: #{tpu_custom_call.1} parent=43 // pred_fallthru
          _
      $region44: #{tpu_custom_call.1} parent=5 // pred_fallthru
        _
      %p716 = scmp.le.s32.totalorder 2, %s22
      // Predicated region
      $region65: #{tpu_custom_call.1} parent=5 // pred_check
        %p717 = pneg %p716
      $region66: #{tpu_custom_call.1} parent=5 // pred_check_branch
        %719 = sbr.rel (%p717) target = $region68
      $region67: #{tpu_custom_call.1} parent=5 // pred_region
        %s720 = ssub.s32 %s22, 2
        // Predicated region
        $region69: #{tpu_custom_call.1} parent=67 // pred_check
          %p721 = pneg %p187
        $region70: #{tpu_custom_call.1} parent=67 // pred_check_branch
          %723 = sbr.rel (%p721) target = $region72
        $region71: #{tpu_custom_call.1} parent=67 // pred_region
          %s724 = sand.u32 %s172, 1
          %s725 = scalar_lea.sflag [#allocation4], %s724
          %s726 = sand.u32 %s172, 1
          %s727 = smul.addr %s726, 8
          %s728 = scalar_lea.vmem [#allocation10], %s727
          %729 = dma.done %s725, 128
        $region72: #{tpu_custom_call.1} parent=67 // pred_fallthru
          _
      $region68: #{tpu_custom_call.1} parent=5 // pred_fallthru
        _
    $region6: #{tpu_custom_call.1} parent=1 // loop_footer
      %s26 = sadd.s32 1, %s22
    $region7: #{tpu_custom_call.1} parent=1 // loop_footer_branch
      %21 = sbr.rel target = $region3
    $region8: #{tpu_custom_call.1} parent=1 // loop_exit
      _
    %730 = vsyncpa [#allocation3], 1
    %s731 = scalar_lea.sflag [#allocation3], 1
    %732 = vsyncpa %s731, 1
    %733 = vsyncpa [#allocation6], 1
    %s734 = scalar_lea.sflag [#allocation6], 1
    %735 = vsyncpa %s734, 1
    %736 = vsyncpa [#allocation9], 1
    %737 = vsyncpa [#allocation4], 1
    %s738 = scalar_lea.sflag [#allocation4], 1
    %739 = vsyncpa %s738, 1

</llo_original>
